<compile_context>
chip_gen: v5e
topology: v5e:2x2
jax: 0.10.0
libtpu: 0.0.40
codegen_flags: <defaults>
</compile_context>

<pallas_src>
import functools

import jax
import jax.numpy as jnp
from jax import lax
from jax.experimental import pallas as pl
from jax.experimental.pallas import tpu as pltpu


def _round_up(n: int, m: int) -> int:
    return ((n + m - 1) // m) * m


def _pedrec_mtl_kernel(x_ref, w1_ref, b1_ref, w2_ref, b2_ref, out_ref, acc_ref,
                       *, bt_size, p_tile, p_true, inv_p, ragged):
    # Grid: (b, p) with b the "parallel" batch-block axis, p the "arbitrary"
    # spatial-reduction axis.
    #   x_ref  : (Bt, C, Pt)         activation tile (NCHW-derived, P on lanes)
    #   w1_ref : (C_out_pad, C)      conv1x1 weight (torch [C_out, C_in] layout)
    #   b1_ref : (C_out_pad, 1)      conv bias (f32, column)
    #   w2_ref : (C_out_pad, K_pad)  fc weight transposed (f32)
    #   b2_ref : (1, K_pad)          fc bias (f32, row)
    #   out_ref: (1, Bt, K_pad)      model outputs for this batch block
    #   acc_ref: (C_out_pad, Bt) f32 running spatial sum of ReLU(conv1x1)
    p = pl.program_id(1)

    @pl.when(p == 0)
    def _init():
        acc_ref[...] = jnp.zeros_like(acc_ref)

    if ragged:
        # Only emitted when P is not a multiple of Pt (trace-time condition).
        pos = p * p_tile + lax.broadcasted_iota(jnp.int32, (1, p_tile), 1)
        lane_valid = pos < p_true                       # (1, Pt) bool
        lane_valid_f = lane_valid.astype(jnp.float32)

    # One 2-D MXU matmul per sample of the batch sub-block (static unroll; the
    # kernel is HBM-bound on the x stream, so the MXU is free filler).
    for bt in range(bt_size):
        x = x_ref[bt]                                   # (C, Pt)
        if ragged:
            # Zero out-of-bounds lanes of the (unpadded) last tile *before*
            # the matmul so garbage VMEM can never reach the accumulator.
            x = jnp.where(lane_valid, x, jnp.zeros((), x.dtype))
        h = jnp.dot(w1_ref[...], x,
                    preferred_element_type=jnp.float32)  # (C_out_pad, Pt), f32 acc
        h = jnp.maximum(h + b1_ref[...], 0.0)            # bias + ReLU (f32)
        if ragged:
            h = h * lane_valid_f                         # ReLU(b1) on padded lanes must not pool
        acc_ref[:, bt:bt + 1] += jnp.sum(h, axis=-1, keepdims=True)

    # Finalize: mean over true P, FC head, lane-dense store.
    @pl.when(p == pl.num_programs(1) - 1)
    def _finalize():
        for bt in range(bt_size):
            pooled = acc_ref[:, bt:bt + 1] * inv_p                         # (C_out_pad, 1)
            row = jnp.sum(w2_ref[...] * pooled, axis=0,
                          keepdims=True) + b2_ref[...]                     # (1, K_pad)
            out_ref[0, bt:bt + 1, :] = row.astype(out_ref.dtype)


def _choose_tiles(B, C, P, itemsize, *, target_bytes, x_block_cap):
    """Pick (Bt, Pt, n_p) so each grid step moves >= target_bytes of x (when
    possible) while staying under the per-block VMEM cap and keeping >= 2
    batch blocks for v7x's two TensorCores."""
    # Spatial tile: multiple of 128 lanes, or the full P in one step (always a
    # legal block dim).  No wrapper-side padding of x in either case.
    want_lanes = max(128, target_bytes // max(1, C * itemsize))
    Pt = _round_up(want_lanes, 128)
    if Pt >= P:
        Pt = P
    n_p = pl.cdiv(P, Pt)

    # Batch sub-block: grow over divisors of B until the per-step x block hits
    # the target.  Cap at B//2 (when B >= 2) so the "parallel" batch axis still
    # has >= 2 blocks for v7x's two TensorCores, and at 8 to bound the static
    # unroll / live-range growth inside the kernel.
    per_sample = C * Pt * itemsize
    max_bt = B if B < 2 else max(1, B // 2)
    max_bt = min(max_bt, 8)
    Bt = 1
    for cand in range(1, max_bt + 1):
        if B % cand:
            continue
        if cand * per_sample > x_block_cap:   # keep double-buffered x in budget
            break
        Bt = cand
        if cand * per_sample >= target_bytes:
            break
    return Bt, Pt, n_p


def pedrec_mtl_forward(inputs_nchw, targets, params, *,
                       p_tile=None, b_tile=None, target_bytes=1 << 20):
    """Mirrors PedRecNetMTLWrapper.forward(inputs, targets).

    inputs_nchw: [B, C, H, W] float32 or bfloat16 (PyTorch NCHW convention)
    targets    : [B, K]       float32
    params     : torch-layout (w1[C_out,C], b1[C_out], w2[K,C_out], b2[K])
    returns    : (outputs [B, K] float32, scalar loss)
    """
    w1, b1, w2, b2 = params
    B, C, H, W = inputs_nchw.shape
    C_out = w1.shape[0]
    K = w2.shape[0]
    P = H * W

    # Free reshape (merges contiguous H,W) — no HBM transpose, no padding pass.
    x_bcp = inputs_nchw.reshape(B, C, P)
    cdt = x_bcp.dtype
    itemsize = x_bcp.dtype.itemsize

    x_block_cap = 4 << 20                       # per-buffer x cap (double-buffered)
    Bt, Pt, n_p = _choose_tiles(B, C, P, itemsize,
                                target_bytes=target_bytes,
                                x_block_cap=x_block_cap)
    # Optional explicit overrides (testing / per-generation tuning).
    if p_tile is not None:
        Pt = P if p_tile >= P else _round_up(p_tile, 128)
        n_p = pl.cdiv(P, Pt)
    if b_tile is not None:
        assert B % b_tile == 0, "b_tile must divide B"
        Bt = b_tile
    ragged = (P % Pt) != 0

    C_out_pad = _round_up(C_out, 8)             # sublane alignment
    K_pad = _round_up(K, 128)                   # lane-dense output stores

    w1_p = jnp.zeros((C_out_pad, C), jnp.float32).at[:C_out].set(
        w1.astype(jnp.float32)).astype(cdt)
    b1_p = jnp.zeros((C_out_pad, 1), jnp.float32).at[:C_out, 0].set(
        b1.astype(jnp.float32))
    w2_p = jnp.zeros((C_out_pad, K_pad), jnp.float32).at[:C_out, :K].set(
        w2.T.astype(jnp.float32))
    b2_p = jnp.zeros((1, K_pad), jnp.float32).at[0, :K].set(b2.astype(jnp.float32))

    grid = (B // Bt, n_p)

    kernel = functools.partial(
        _pedrec_mtl_kernel,
        bt_size=Bt, p_tile=Pt, p_true=P, inv_p=1.0 / P, ragged=ragged)

    # VMEM budget derived from the actual footprint (v7x: 64 MiB physical).
    x_block_bytes = Bt * C * Pt * itemsize
    out_block_bytes = Bt * K_pad * 4
    h_bytes = C_out_pad * Pt * 4                # per-sample conv intermediate (f32)
    weight_bytes = (C_out_pad * C * itemsize + C_out_pad * 4
                    + C_out_pad * K_pad * 4 + K_pad * 4)
    acc_bytes = 8 * 128 * 4 * pl.cdiv(C_out_pad, 8) * pl.cdiv(Bt, 128)
    vmem_est = (2 * (x_block_bytes + out_block_bytes)   # double-buffered I/O blocks
                + 2 * weight_bytes                      # (conservative) const buffers
                + 2 * h_bytes + acc_bytes)
    vmem_limit = int(min(48 * 1024 * 1024, max(4 * 1024 * 1024, 2 * vmem_est)))

    cost = pl.CostEstimate(
        flops=2 * B * P * C * C_out_pad + 2 * B * C_out_pad * K_pad,
        transcendentals=0,
        bytes_accessed=(B * C * P * itemsize + weight_bytes
                        + (B // Bt) * out_block_bytes))

    out3d = pl.pallas_call(
        kernel,
        grid_spec=pltpu.PrefetchScalarGridSpec(
            num_scalar_prefetch=0,
            grid=grid,
            in_specs=[
                pl.BlockSpec((Bt, C, Pt), lambda b, p: (b, 0, p)),       # x
                pl.BlockSpec((C_out_pad, C), lambda b, p: (0, 0)),        # w1
                pl.BlockSpec((C_out_pad, 1), lambda b, p: (0, 0)),        # b1
                pl.BlockSpec((C_out_pad, K_pad), lambda b, p: (0, 0)),    # w2
                pl.BlockSpec((1, K_pad), lambda b, p: (0, 0)),            # b2
            ],
            out_specs=pl.BlockSpec((1, Bt, K_pad), lambda b, p: (b, 0, 0)),
            scratch_shapes=[pltpu.VMEM((C_out_pad, Bt), jnp.float32)],
        ),
        out_shape=jax.ShapeDtypeStruct((B // Bt, Bt, K_pad), jnp.float32),
        compiler_params=pltpu.CompilerParams(
            dimension_semantics=("parallel", "arbitrary"),
            vmem_limit_bytes=vmem_limit),
        cost_estimate=cost,
    )(x_bcp, w1_p, b1_p, w2_p, b2_p)

    outputs = out3d.reshape(B, K_pad)[:, :K]
    # loss_head (MSE) is a trivial BxK op: kept in the wrapper so the kernel
    # carries a single large x stream and one small lane-dense output stream.
    loss = jnp.mean((outputs - targets.astype(jnp.float32)) ** 2)
    return outputs, loss


def _reference_forward(inputs_nchw, targets, params):
    """Plain-JAX reference (same layouts / dtypes as the kernel path)."""
    w1, b1, w2, b2 = params
    B, C, H, W = inputs_nchw.shape
    x = inputs_nchw.reshape(B, C, H * W)
    h = jnp.einsum('oc,bcp->bop', w1.astype(x.dtype), x,
                   preferred_element_type=jnp.float32)
    h = jnp.maximum(h + b1.astype(jnp.float32)[None, :, None], 0.0)
    pooled = jnp.mean(h, axis=2)                                    # [B, C_out]
    out = pooled @ w2.T.astype(jnp.float32) + b2.astype(jnp.float32)[None, :]
    loss = jnp.mean((out - targets.astype(jnp.float32)) ** 2)
    return out, loss


def _init_params(key, C, C_out, K):
    # torch layouts: conv1x1 weight [C_out, C_in], fc weight [K, C_out]
    k1, k2, k3, k4 = jax.random.split(key, 4)
    w1 = jax.random.normal(k1, (C_out, C), jnp.float32) * 0.1
    b1 = jax.random.normal(k2, (C_out,), jnp.float32) * 0.01
    w2 = jax.random.normal(k3, (K, C_out), jnp.float32) * 0.1
    b2 = jax.random.normal(k4, (K,), jnp.float32) * 0.01
    return (w1, b1, w2, b2)


# TODO(synk): the real wrapper composes arbitrary injected `model`/`loss_head`
# nn.Modules; only the synthetic conv1x1->pool->FC model and MSE head above are
# implemented in Pallas.

if __name__ == "__main__":
    B, C, H, W = 2, 8, 16, 16     # NCHW input, PyTorch convention
    C_out, K = 16, 16

    key = jax.random.PRNGKey(0)
    k_in, k_tgt, k_p, k_in2 = jax.random.split(key, 4)
    inputs = jax.random.normal(k_in, (B, C, H, W), jnp.float32)
    targets = jax.random.normal(k_tgt, (B, K), jnp.float32)
    params = _init_params(k_p, C, C_out, K)

    # Tolerances absorb TPU default-precision (bf16-pass) matmul differences
    # between the XLA reference einsum and the in-kernel MXU matmul.
    TOL = dict(atol=5e-3, rtol=5e-3)

    # 1) Auto-tiled f32 path: full P in one step, Bt chosen automatically.
    out1, loss1 = pedrec_mtl_forward(inputs, targets, params)
    out1 = jax.block_until_ready(out1); loss1 = jax.block_until_ready(loss1)
    ref_out, ref_loss = _reference_forward(inputs, targets, params)
    assert out1.shape == (B, K)
    assert jnp.allclose(out1, ref_out, **TOL)
    assert jnp.allclose(loss1, ref_loss, **TOL)

    # 2) Forced multi-step spatial reduction + batch sub-block (exercises the
    #    init/accumulate/finalize pipeline and the Bt unroll).
    out2, loss2 = pedrec_mtl_forward(inputs, targets, params, p_tile=128, b_tile=2)
    out2 = jax.block_until_ready(out2); loss2 = jax.block_until_ready(loss2)
    assert jnp.allclose(out2, ref_out, **TOL)
    assert jnp.allclose(loss2, ref_loss, **TOL)

    # 3) Ragged spatial extent (P=160 not a multiple of the 128-lane tile):
    #    exercises the in-kernel mask path with NO wrapper-side padding.
    inputs_r = jax.random.normal(k_in2, (B, C, 16, 10), jnp.float32)
    out3, loss3 = pedrec_mtl_forward(inputs_r, targets, params, p_tile=128)
    out3 = jax.block_until_ready(out3); loss3 = jax.block_until_ready(loss3)
    ref_out3, ref_loss3 = _reference_forward(inputs_r, targets, params)
    assert jnp.allclose(out3, ref_out3, **TOL)
    assert jnp.allclose(loss3, ref_loss3, **TOL)

    # 4) bfloat16 activation/weight path (halves x HBM traffic on v6e/v7x;
    #    MXU accumulation and all elementwise math stay f32 — v5e-safe).
    inputs_bf16 = inputs.astype(jnp.bfloat16)
    out_b, loss_b = pedrec_mtl_forward(inputs_bf16, targets, params)
    out_b = jax.block_until_ready(out_b); loss_b = jax.block_until_ready(loss_b)
    ref_out_b, ref_loss_b = _reference_forward(inputs_bf16, targets, params)
    assert jnp.allclose(out_b, ref_out_b, atol=2e-2, rtol=2e-2)
    assert jnp.allclose(loss_b, ref_loss_b, atol=2e-2, rtol=2e-2)

    print("KERNEL_OK")
</pallas_src>

<mosaic_0001>
module attributes {stable_mosaic.version = 11 : i64} {
  func.func @_pedrec_mtl_kernel(%arg0: i32, %arg1: i32, %arg2: memref<1x8x256xf32, #tpu.memory_space<vmem>>, %arg3: memref<16x8xf32, #tpu.memory_space<vmem>>, %arg4: memref<16x1xf32, #tpu.memory_space<vmem>>, %arg5: memref<16x128xf32, #tpu.memory_space<vmem>>, %arg6: memref<1x128xf32, #tpu.memory_space<vmem>>, %arg7: memref<1x1x128xf32, #tpu.memory_space<vmem>>, %arg8: memref<16x1xf32, #tpu.memory_space<vmem>>) attributes {dimension_semantics = [#tpu.dimension_semantics<parallel>, #tpu.dimension_semantics<arbitrary>], iteration_bounds = array<i64: 2, 1>, scalar_prefetch = 0 : i64, scratch_operands = 1 : i64, tpu.core_type = #tpu.core_type<tc>, window_params = [{transform_indices = @transform_0, window_bounds = array<i64: 1, 8, 256>}, {pipeline_mode = #tpu.pipeline_mode<synchronous>, transform_indices = @transform_1, window_bounds = array<i64: 16, 8>}, {pipeline_mode = #tpu.pipeline_mode<synchronous>, transform_indices = @transform_2, window_bounds = array<i64: 16, 1>}, {pipeline_mode = #tpu.pipeline_mode<synchronous>, transform_indices = @transform_3, window_bounds = array<i64: 16, 128>}, {pipeline_mode = #tpu.pipeline_mode<synchronous>, transform_indices = @transform_4, window_bounds = array<i64: 1, 128>}, {transform_indices = @transform_5, window_bounds = array<i64: 1, 1, 128>}]} {
    %c0_i32 = arith.constant 0 : i32
    %0 = arith.cmpi eq, %arg1, %c0_i32 : i32
    %1 = arith.extui %0 : i1 to i32
    %c0_i32_0 = arith.constant 0 : i32
    %2 = arith.cmpi ne, %1, %c0_i32_0 : i32
    scf.if %2 {
      %cst_15 = arith.constant 0.000000e+00 : f32
      %20 = vector.broadcast %cst_15 : f32 to vector<16x1xf32>
      %c0_16 = arith.constant 0 : index
      %c0_17 = arith.constant 0 : index
      %21 = vector.load %arg8[%c0_16, %c0_17] : memref<16x1xf32, #tpu.memory_space<vmem>>, vector<16x1xf32>
      tpu.vector_store %arg8[%c0_16, %c0_17], %20 {strides = array<i32>} : memref<16x1xf32, #tpu.memory_space<vmem>>, vector<16x1xf32>,
    } else {
    }
    %c0 = arith.constant 0 : index
    %c0_1 = arith.constant 0 : index
    %c0_2 = arith.constant 0 : index
    %3 = vector.load %arg2[%c0, %c0_1, %c0_2] : memref<1x8x256xf32, #tpu.memory_space<vmem>>, vector<1x8x256xf32>
    %4 = vector.shape_cast %3 : vector<1x8x256xf32> to vector<8x256xf32>
    %c0_3 = arith.constant 0 : index
    %c0_4 = arith.constant 0 : index
    %5 = vector.load %arg3[%c0_3, %c0_4] : memref<16x8xf32, #tpu.memory_space<vmem>>, vector<16x8xf32>
    %cst = arith.constant dense<0.000000e+00> : vector<16x256xf32>
    %6 = tpu.matmul %5, %4, %cst {dimension_numbers = #tpu.dot_dimension_numbers<[1], [0], [0], [1], [0, 0, 1, 1], [], []>} : vector<16x8xf32>, vector<8x256xf32>, vector<16x256xf32> -> vector<16x256xf32>
    %c0_5 = arith.constant 0 : index
    %c0_6 = arith.constant 0 : index
    %7 = vector.load %arg4[%c0_5, %c0_6] : memref<16x1xf32, #tpu.memory_space<vmem>>, vector<16x1xf32>
    %8 = vector.broadcast %7 : vector<16x1xf32> to vector<16x256xf32>
    %9 = arith.addf %6, %8 : vector<16x256xf32>
    %cst_7 = arith.constant 0.000000e+00 : f32
    %10 = vector.broadcast %cst_7 : f32 to vector<16x256xf32>
    %11 = arith.maximumf %9, %10 : vector<16x256xf32>
    %c0_8 = arith.constant 0 : index
    %c0_9 = arith.constant 0 : index
    %12 = vector.load %arg8[%c0_8, %c0_9] : memref<16x1xf32, #tpu.memory_space<vmem>>, vector<16x1xf32>
    %cst_10 = arith.constant dense<0.000000e+00> : vector<16xf32>
    %13 = vector.multi_reduction <add>, %11, %cst_10 [1] : vector<16x256xf32> to vector<16xf32>
    %14 = vector.shape_cast %13 : vector<16xf32> to vector<16x1xf32>
    %15 = arith.addf %12, %14 : vector<16x1xf32>
    %c0_11 = arith.constant 0 : index
    %c0_12 = arith.constant 0 : index
    %16 = vector.load %arg8[%c0_11, %c0_12] : memref<16x1xf32, #tpu.memory_space<vmem>>, vector<16x1xf32>
    tpu.vector_store %arg8[%c0_11, %c0_12], %15 {strides = array<i32>} : memref<16x1xf32, #tpu.memory_space<vmem>>, vector<16x1xf32>,
    %c0_i32_13 = arith.constant 0 : i32
    %17 = arith.cmpi eq, %arg1, %c0_i32_13 : i32
    %18 = arith.extui %17 : i1 to i32
    %c0_i32_14 = arith.constant 0 : i32
    %19 = arith.cmpi ne, %18, %c0_i32_14 : i32
    scf.if %19 {
      %c0_15 = arith.constant 0 : index
      %c0_16 = arith.constant 0 : index
      %20 = vector.load %arg8[%c0_15, %c0_16] : memref<16x1xf32, #tpu.memory_space<vmem>>, vector<16x1xf32>
      %cst_17 = arith.constant 3.906250e-03 : f32
      %21 = vector.broadcast %cst_17 : f32 to vector<16x1xf32>
      %22 = arith.mulf %20, %21 : vector<16x1xf32>
      %c0_18 = arith.constant 0 : index
      %c0_19 = arith.constant 0 : index
      %23 = vector.load %arg5[%c0_18, %c0_19] : memref<16x128xf32, #tpu.memory_space<vmem>>, vector<16x128xf32>
      %24 = vector.broadcast %22 : vector<16x1xf32> to vector<16x128xf32>
      %25 = arith.mulf %23, %24 : vector<16x128xf32>
      %cst_20 = arith.constant dense<0.000000e+00> : vector<128xf32>
      %26 = vector.multi_reduction <add>, %25, %cst_20 [0] : vector<16x128xf32> to vector<128xf32>
      %27 = vector.shape_cast %26 : vector<128xf32> to vector<1x128xf32>
      %c0_21 = arith.constant 0 : index
      %c0_22 = arith.constant 0 : index
      %28 = vector.load %arg6[%c0_21, %c0_22] : memref<1x128xf32, #tpu.memory_space<vmem>>, vector<1x128xf32>
      %29 = arith.addf %27, %28 : vector<1x128xf32>
      %c0_23 = arith.constant 0 : index
      %c0_24 = arith.constant 0 : index
      %c0_25 = arith.constant 0 : index
      %30 = vector.load %arg7[%c0_23, %c0_24, %c0_25] : memref<1x1x128xf32, #tpu.memory_space<vmem>>, vector<1x1x128xf32>
      %31 = vector.shape_cast %30 : vector<1x1x128xf32> to vector<1x128xf32>
      %32 = vector.shape_cast %29 : vector<1x128xf32> to vector<1x1x128xf32>
      tpu.vector_store %arg7[%c0_23, %c0_24, %c0_25], %32 {strides = array<i32>} : memref<1x1x128xf32, #tpu.memory_space<vmem>>, vector<1x1x128xf32>,
    } else {
    }
    return
  }
  func.func @transform_0(%arg0: i32, %arg1: i32) -> (i32, i32, i32) {
    %c0_i32 = arith.constant 0 : i32
    %c0_i32_0 = arith.constant 0 : i32
    return %arg0, %c0_i32, %arg1 : i32, i32, i32
  }
  func.func @transform_1(%arg0: i32, %arg1: i32) -> (i32, i32) {
    %c0_i32 = arith.constant 0 : i32
    %c0_i32_0 = arith.constant 0 : i32
    %c0_i32_1 = arith.constant 0 : i32
    return %c0_i32, %c0_i32_0 : i32, i32
  }
  func.func @transform_2(%arg0: i32, %arg1: i32) -> (i32, i32) {
    %c0_i32 = arith.constant 0 : i32
    %c0_i32_0 = arith.constant 0 : i32
    %c0_i32_1 = arith.constant 0 : i32
    return %c0_i32, %c0_i32_0 : i32, i32
  }
  func.func @transform_3(%arg0: i32, %arg1: i32) -> (i32, i32) {
    %c0_i32 = arith.constant 0 : i32
    %c0_i32_0 = arith.constant 0 : i32
    %c0_i32_1 = arith.constant 0 : i32
    return %c0_i32, %c0_i32_0 : i32, i32
  }
  func.func @transform_4(%arg0: i32, %arg1: i32) -> (i32, i32) {
    %c0_i32 = arith.constant 0 : i32
    %c0_i32_0 = arith.constant 0 : i32
    %c0_i32_1 = arith.constant 0 : i32
    return %c0_i32, %c0_i32_0 : i32, i32
  }
  func.func @transform_5(%arg0: i32, %arg1: i32) -> (i32, i32, i32) {
    %c0_i32 = arith.constant 0 : i32
    %c0_i32_0 = arith.constant 0 : i32
    %c0_i32_1 = arith.constant 0 : i32
    return %arg0, %c0_i32, %c0_i32_0 : i32, i32, i32
  }
}

</mosaic_0001>

<llo_original>
// kernel: tpu_custom_call.1
$region0: #{tpu_custom_call.1}
  #allocation0 [shape = 'u32[]', space=smem, size = 0x4, offset = 0x4, fixed_abs, tag = 'smem constant byte address 0x4 - core index']
  #allocation1 [shape = 'u32[72,128]{1,0:T(1,128)}', space=vmem, size = 0x9000, scoped, tag = 'internal scratch']
  #allocation2 [shape = 'f32[16,1]{1,0:T(8,128)}', space=vmem, size = 0x2000, scoped, tag = 'scratch operand']
  %s0 = inlined_call_operand.vmem [shape: f32[2,8,256], index: 0, kind: input, shape index: {}]
  %s1 = inlined_call_operand.vmem [shape: f32[16,8], index: 1, kind: input, shape index: {}]
  %s2 = inlined_call_operand.vmem [shape: f32[16,1], index: 2, kind: input, shape index: {}]
  %s3 = inlined_call_operand.hbm [shape: f32[16,128], index: 3, kind: input, shape index: {}]
  %s4 = inlined_call_operand.vmem [shape: f32[1,128], index: 4, kind: input, shape index: {}]
  %s5 = inlined_call_operand.hbm [shape: f32[2,1,128], index: 5, kind: output, shape index: {}]
  %s6 = sld [smem:[#allocation0]]
  $region65: #{tpu_custom_call.1} parent=0
    _
  %s8 = ssub.s32 1, %s6
  %s9 = scalar_select 0, %s8, %s6
  $region1: #{tpu_custom_call.1} parent=0
    #allocation3 [shape = 'u8[8192]{0}', space=vmem, size = 0x2000, scoped, tag = 'input window, operand 3, single buffered']
    #allocation4 [shape = 's32[2]{0}', space=sflag, size = 0x8, scoped, tag = 'scoped memory for tpu_custom_call.1']
    #allocation5 [shape = 's32[2]{0}', space=sflag, size = 0x8, scoped, tag = 'scoped memory for tpu_custom_call.1']
    #allocation6 [shape = 'u8[1024]{0}', space=vmem, size = 0x400, scoped, tag = 'output window, operand 0']
    %10 = vsyncpa [#allocation4], 0
    %11 = vsyncpa [#allocation5], 0
    %s12 = scalar_lea.sflag [#allocation5], 1
    %13 = vsyncpa %s12, 0
    loop: start=0, step=1, limit=4
    $region2: #{tpu_custom_call.1} parent=1 // loop_pre_header
      _
    $region3: #{tpu_custom_call.1} parent=1 // loop_header
      %s15 = sphi 0, %s19
      %p16 = scmp.ge.s32.totalorder %s15, 4
      %s22 = sphi 0, %s34
      %s23 = sphi 0, %s30
      %s24 = sphi 0, %s22
      %s25 = sphi 0, %s23
      %s26 = sphi 0, %s24
      %s27 = sphi 0, %s25
      %s39 = sphi 0, %s41
      %s42 = sphi 0, %s39
      %s43 = sphi 0, %s42
      %s59 = sphi 0, %s43
      %s63 = sphi 0, %s63
      %s65 = sphi 0, %s63
      %s66 = sphi 0, %s65
      %s80 = sphi 0, %s66
      %s84 = sphi 0, %s84
      %s86 = sphi 0, %s84
      %s87 = sphi 0, %s86
      %s101 = sphi 0, %s87
      %s105 = sphi 0, %s105
      %s107 = sphi 0, %s105
      %s108 = sphi 0, %s107
      %s122 = sphi 0, %s108
      %s126 = sphi 0, %s126
      %s128 = sphi 0, %s126
      %s129 = sphi 0, %s128
      %s143 = sphi 0, %s129
      %s149 = sphi 0, %s151
      %s152 = sphi 0, %s149
      %s153 = sphi 0, %s152
      %s169 = sphi 0, %s153
    $region4: #{tpu_custom_call.1} parent=1 // loop_header_branch
      %18 = sbr.rel (%p16) target = $region8
    $region5: #{tpu_custom_call.1} parent=1 // loop_body
      %s20 = ssub.s32 %s15, 1
      %s21 = ssub.s32 %s15, 2
      %s28 = sadd.s32 1, %s23
      %p29 = scmp.ge.s32.totalorder %s28, 1
      %s30 = scalar_select %p29, 0, %s28
      %s31 = sadd.s32 1, %s22
      %s32 = scalar_select %p29, %s31, %s22
      %p33 = scmp.ge.s32.totalorder %s32, 2
      %s34 = scalar_select %p33, 0, %s32
      %s35 = ssub.s32 %s22, %s34
      %s36 = ssub.s32 %s23, %s30
      %s37 = sor.u32 %s35, %s36
      %p38 = scmp.eq.s32.totalorder %s37, 0
      %s40 = sadd.s32 %s39, 1
      %s41 = scalar_select %p38, %s39, %s40
      %p44 = pneg %p38
      %p45 = scmp.eq.s32.totalorder %s15, 1
      %p46 = por %p44, %p45
      %p47 = scmp.ne.s32.totalorder %s39, %s42
      %p48 = scmp.eq.s32.totalorder %s15, 0
      %p49 = por %p47, %p48
      %p50 = scmp.ne.s32.totalorder %s39, %s42
      %p51 = scmp.eq.s32.totalorder %s20, 1
      %p52 = por %p50, %p51
      %p53 = scmp.ne.s32.totalorder %s42, %s43
      %p54 = scmp.eq.s32.totalorder %s20, 0
      %p55 = por %p53, %p54
      %p56 = scmp.ne.s32.totalorder %s42, %s43
      %p57 = scmp.eq.s32.totalorder %s21, 1
      %p58 = por %p56, %p57
      %p60 = scmp.ne.s32.totalorder %s43, %s59
      %p61 = scmp.eq.s32.totalorder %s21, 0
      %p62 = por %p60, %p61
      %s64 = sadd.s32 %s63, 1
      %p67 = scmp.eq.s32.totalorder %s15, 1
      %p68 = scmp.ne.s32.totalorder %s63, %s65
      %p69 = scmp.eq.s32.totalorder %s15, 0
      %p70 = por %p68, %p69
      %p71 = scmp.ne.s32.totalorder %s63, %s65
      %p72 = scmp.eq.s32.totalorder %s20, 1
      %p73 = por %p71, %p72
      %p74 = scmp.ne.s32.totalorder %s65, %s66
      %p75 = scmp.eq.s32.totalorder %s20, 0
      %p76 = por %p74, %p75
      %p77 = scmp.ne.s32.totalorder %s65, %s66
      %p78 = scmp.eq.s32.totalorder %s21, 1
      %p79 = por %p77, %p78
      %p81 = scmp.ne.s32.totalorder %s66, %s80
      %p82 = scmp.eq.s32.totalorder %s21, 0
      %p83 = por %p81, %p82
      %s85 = sadd.s32 %s84, 1
      %p88 = scmp.eq.s32.totalorder %s15, 1
      %p89 = scmp.ne.s32.totalorder %s84, %s86
      %p90 = scmp.eq.s32.totalorder %s15, 0
      %p91 = por %p89, %p90
      %p92 = scmp.ne.s32.totalorder %s84, %s86
      %p93 = scmp.eq.s32.totalorder %s20, 1
      %p94 = por %p92, %p93
      %p95 = scmp.ne.s32.totalorder %s86, %s87
      %p96 = scmp.eq.s32.totalorder %s20, 0
      %p97 = por %p95, %p96
      %p98 = scmp.ne.s32.totalorder %s86, %s87
      %p99 = scmp.eq.s32.totalorder %s21, 1
      %p100 = por %p98, %p99
      %p102 = scmp.ne.s32.totalorder %s87, %s101
      %p103 = scmp.eq.s32.totalorder %s21, 0
      %p104 = por %p102, %p103
      %s106 = sadd.s32 %s105, 1
      %p109 = scmp.eq.s32.totalorder %s15, 1
      %p110 = scmp.ne.s32.totalorder %s105, %s107
      %p111 = scmp.eq.s32.totalorder %s15, 0
      %p112 = por %p110, %p111
      %p113 = scmp.ne.s32.totalorder %s105, %s107
      %p114 = scmp.eq.s32.totalorder %s20, 1
      %p115 = por %p113, %p114
      %p116 = scmp.ne.s32.totalorder %s107, %s108
      %p117 = scmp.eq.s32.totalorder %s20, 0
      %p118 = por %p116, %p117
      %p119 = scmp.ne.s32.totalorder %s107, %s108
      %p120 = scmp.eq.s32.totalorder %s21, 1
      %p121 = por %p119, %p120
      %p123 = scmp.ne.s32.totalorder %s108, %s122
      %p124 = scmp.eq.s32.totalorder %s21, 0
      %p125 = por %p123, %p124
      %s127 = sadd.s32 %s126, 1
      %p130 = scmp.eq.s32.totalorder %s15, 1
      %p131 = scmp.ne.s32.totalorder %s126, %s128
      %p132 = scmp.eq.s32.totalorder %s15, 0
      %p133 = por %p131, %p132
      %p134 = scmp.ne.s32.totalorder %s126, %s128
      %p135 = scmp.eq.s32.totalorder %s20, 1
      %p136 = por %p134, %p135
      %p137 = scmp.ne.s32.totalorder %s128, %s129
      %p138 = scmp.eq.s32.totalorder %s20, 0
      %p139 = por %p137, %p138
      %p140 = scmp.ne.s32.totalorder %s128, %s129
      %p141 = scmp.eq.s32.totalorder %s21, 1
      %p142 = por %p140, %p141
      %p144 = scmp.ne.s32.totalorder %s129, %s143
      %p145 = scmp.eq.s32.totalorder %s21, 0
      %p146 = por %p144, %p145
      %s147 = ssub.s32 %s22, %s34
      %p148 = scmp.eq.s32.totalorder %s147, 0
      %s150 = sadd.s32 %s149, 1
      %s151 = scalar_select %p148, %s149, %s150
      %p154 = pneg %p148
      %p155 = scmp.eq.s32.totalorder %s15, 1
      %p156 = por %p154, %p155
      %p157 = scmp.ne.s32.totalorder %s149, %s152
      %p158 = scmp.eq.s32.totalorder %s15, 0
      %p159 = por %p157, %p158
      %p160 = scmp.ne.s32.totalorder %s149, %s152
      %p161 = scmp.eq.s32.totalorder %s20, 1
      %p162 = por %p160, %p161
      %p163 = scmp.ne.s32.totalorder %s152, %s153
      %p164 = scmp.eq.s32.totalorder %s20, 0
      %p165 = por %p163, %p164
      %p166 = scmp.ne.s32.totalorder %s152, %s153
      %p167 = scmp.eq.s32.totalorder %s21, 1
      %p168 = por %p166, %p167
      %p170 = scmp.ne.s32.totalorder %s153, %s169
      %p171 = scmp.eq.s32.totalorder %s21, 0
      %p172 = por %p170, %p171
      %p173 = scmp.le.s32.totalorder 1, %s15
      %p174 = scmp.lt.s32.totalorder %s15, 3
      %p175 = pnand %p173, %p174
      %p176 = pneg %p175
      // Predicated region
      $region9: #{tpu_custom_call.1} parent=5 // pred_check
        _
      $region10: #{tpu_custom_call.1} parent=5 // pred_check_branch
        %178 = sbr.rel (%p175) target = $region12
      $region11: #{tpu_custom_call.1} parent=5 // pred_region
        %s179 = ssub.s32 %s15, 1
        // Predicated region
        $region13: #{tpu_custom_call.1} parent=11 // pred_check
          %p180 = pneg %p76
        $region14: #{tpu_custom_call.1} parent=11 // pred_check_branch
          %182 = sbr.rel (%p180) target = $region16
        $region15: #{tpu_custom_call.1} parent=11 // pred_region
          _
        $region16: #{tpu_custom_call.1} parent=11 // pred_fallthru
          _
        // Predicated region
        $region17: #{tpu_custom_call.1} parent=11 // pred_check
          %p183 = pneg %p97
        $region18: #{tpu_custom_call.1} parent=11 // pred_check_branch
          %185 = sbr.rel (%p183) target = $region20
        $region19: #{tpu_custom_call.1} parent=11 // pred_region
          _
        $region20: #{tpu_custom_call.1} parent=11 // pred_fallthru
          _
        // Predicated region
        $region21: #{tpu_custom_call.1} parent=11 // pred_check
          %p186 = pneg %p118
        $region22: #{tpu_custom_call.1} parent=11 // pred_check_branch
          %188 = sbr.rel (%p186) target = $region24
        $region23: #{tpu_custom_call.1} parent=11 // pred_region
          %190 = vsyncadd [#allocation4], 0
          %s191 = sshll.u32 %s3, 4
          %s192 = int_to_ptr.hbm [resolvable:$true] %s191
          %s193 = sshll.u32 [#allocation3], 4
          %s194 = int_to_ptr.vmem [resolvable:$true] %s193
          %199 = dma.hbm_to_vmem [thread:$0]  %s192, 256, %s194, [#allocation4], 128, 128, 8
        $region24: #{tpu_custom_call.1} parent=11 // pred_fallthru
          _
        // Predicated region
        $region25: #{tpu_custom_call.1} parent=11 // pred_check
          %p200 = pneg %p139
        $region26: #{tpu_custom_call.1} parent=11 // pred_check_branch
          %202 = sbr.rel (%p200) target = $region28
        $region27: #{tpu_custom_call.1} parent=11 // pred_region
          _
        $region28: #{tpu_custom_call.1} parent=11 // pred_fallthru
          _
      $region12: #{tpu_custom_call.1} parent=5 // pred_fallthru
        _
      %p203 = scmp.lt.s32.totalorder %s15, 2
      // Predicated region
      $region29: #{tpu_custom_call.1} parent=5 // pred_check
        %p204 = pneg %p203
      $region30: #{tpu_custom_call.1} parent=5 // pred_check_branch
        %206 = sbr.rel (%p204) target = $region32
      $region31: #{tpu_custom_call.1} parent=5 // pred_region
        // Predicated region
        $region33: #{tpu_custom_call.1} parent=31 // pred_check
          %p207 = pneg %p49
        $region34: #{tpu_custom_call.1} parent=31 // pred_check_branch
          %209 = sbr.rel (%p207) target = $region36
        $region35: #{tpu_custom_call.1} parent=31 // pred_region
          %s210 = smul.u32 2, %s23
          %p211 = scmp.lt.s32.totalorder %s22, 1
          %s212 = scalar_select %p211, %s22, 1
          %p213 = scmp.lt.s32.totalorder %s210, 1
          %s214 = scalar_select %p213, %s210, 1
          %s215 = smul.addr %s212, 2
          %s216 = sadd.s32 %s214, %s215
          %s217 = smul.addr %s216, 8
          %s218 = scalar_lea.vmem %s0, %s217
          %s219 = smul.u32 2, %s23
        $region36: #{tpu_custom_call.1} parent=31 // pred_fallthru
          _
      $region32: #{tpu_custom_call.1} parent=5 // pred_fallthru
        _
      %p220 = scmp.le.s32.totalorder 1, %s15
      %p221 = scmp.lt.s32.totalorder %s15, 3
      %p222 = pnand %p220, %p221
      %p223 = pneg %p222
      // Predicated region
      $region37: #{tpu_custom_call.1} parent=5 // pred_check
        _
      $region38: #{tpu_custom_call.1} parent=5 // pred_check_branch
        %225 = sbr.rel (%p222) target = $region40
      $region39: #{tpu_custom_call.1} parent=5 // pred_region
        %s226 = ssub.s32 %s15, 1
        // Predicated region
        $region41: #{tpu_custom_call.1} parent=39 // pred_check
          %p227 = pneg %p118
        $region42: #{tpu_custom_call.1} parent=39 // pred_check_branch
          %229 = sbr.rel (%p227) target = $region44
        $region43: #{tpu_custom_call.1} parent=39 // pred_region
          %231 = dma.done [#allocation4], 256
        $region44: #{tpu_custom_call.1} parent=39 // pred_fallthru
          _
        %s232 = smul.u32 2, %s25
        %p233 = scmp.lt.s32.totalorder %s24, 1
        %s234 = scalar_select %p233, %s24, 1
        %p235 = scmp.lt.s32.totalorder %s232, 1
        %s236 = scalar_select %p235, %s232, 1
        %s237 = smul.addr %s234, 2
        %s238 = sadd.s32 %s236, %s237
        %s239 = smul.addr %s238, 8
        %s240 = scalar_lea.vmem %s0, %s239
        %p241 = pneg %p55
        %p242 = pneg %p52
        %p243 = pneg %p76
        %p244 = pneg %p73
        %p245 = pneg %p97
        %p246 = pneg %p94
        %p247 = pneg %p118
        %p248 = pneg %p115
        %p249 = pneg %p139
        %p250 = pneg %p136
        %p251 = pneg %p165
        %p252 = pneg %p162
        %s253 = sand.u32 %s152, 1
        %s254 = scalar_lea.sflag [#allocation5], %s253
        %s255 = sand.u32 %s152, 1
        %s256 = scalar_lea.vmem [#allocation6], %s255
        %s257 = smul.u32 2, %s25
        %p258 = scmp.lt.s32.totalorder %s24, 1
        %s259 = scalar_select %p258, %s24, 1
        %p260 = scmp.lt.s32.totalorder %s257, 1
        %s261 = scalar_select %p260, %s257, 1
        %s262 = smul.addr %s259, 2
        %s263 = sadd.s32 %s261, %s262
        %s264 = smul.addr %s263, 8
        %s265 = scalar_lea.vmem %s0, %s264
        %s266 = smul.u32 2, %s25
        %p267 = scmp.eq.s32.totalorder %s25, 0
        // Predicated region
        $region45: #{tpu_custom_call.1} parent=39 // pred_check
          %p268 = pneg %p267
        $region46: #{tpu_custom_call.1} parent=39 // pred_check_branch
          %270 = sbr.rel (%p268) target = $region48
        $region47: #{tpu_custom_call.1} parent=39 // pred_region
          %vm271 = vcmask 7168
          %272 = vst.msk [vmem:[#allocation2] sm:$0xff] %vm271, 0.0
          %273 = vst.msk [vmem:[#allocation2 + $0x8] sm:$0xff] %vm271, 0.0
        $region48: #{tpu_custom_call.1} parent=39 // pred_fallthru
          _
        %v274 = vld [vmem:[%s265] sm:$0xff]
        %v275 = vld [vmem:[%s265 + $0x8] sm:$0xff]
        %v276 = vld [vmem:[%s1] sm:$0xff]
        %v277 = vld [vmem:[%s1 + $0x8] sm:$0xff]
        %v278 = vld [vmem:[%s2] sm:$0xff]
        %v279 = vld [vmem:[%s2 + $0x8] sm:$0xff]
        %281 = vset.pattern.permute.xlu0 0
        %282 = vperm.xlu0 %281, %v278
        %v283 = vpop.permute.xlu0 %282
        %286 = vset.pattern.permute.xlu0 0
        %287 = vperm.xlu0 %286, %v279
        %v288 = vpop.permute.xlu0 %287
        %vm290 = vcmask 64512
        %v292 = vsel %vm290, %v276, 0
        %v295 = vsel %vm290, %v277, 0
        %297 = vmatpush.msra.mxu0 0.0
        %298 = vmatpush.msra.mxu0 0.0
        %299 = vmatpush.msra.mxu0 0.0
        %300 = vmatpush.msra.mxu0 0.0
        %301 = vmatpush.msra.mxu0 0.0
        %302 = vmatpush.msra.mxu0 0.0
        %303 = vmatpush.msra.mxu0 0.0
        %304 = vmatpush.msra.mxu0 0.0
        %305 = vmatpush.msra.mxu0 0.0
        %306 = vmatpush.msra.mxu0 0.0
        %307 = vmatpush.msra.mxu0 0.0
        %308 = vmatpush.msra.mxu0 0.0
        %309 = vmatpush.msra.mxu0 0.0
        %310 = vmatpush.msra.mxu0 0.0
        %311 = vmatpush.msra.mxu0 0.0
        %312 = vmatpush.msra.mxu0 %v274
        %313 = vmatmul.f32.gmra.mxu0 %v292
        %v314 = vpop.f32.mrf.mxu0
        %v315 = vadd.f32 %v283, %v314
        %316 = vmatmul.f32.gmra.mxu0 %v295
        %v317 = vpop.f32.mrf.mxu0
        %v318 = vadd.f32 %v288, %v317
        %319 = vdwg.mxu0
        %320 = vmatpush.msra.mxu0 0.0
        %321 = vmatpush.msra.mxu0 0.0
        %322 = vmatpush.msra.mxu0 0.0
        %323 = vmatpush.msra.mxu0 0.0
        %324 = vmatpush.msra.mxu0 0.0
        %325 = vmatpush.msra.mxu0 0.0
        %326 = vmatpush.msra.mxu0 0.0
        %327 = vmatpush.msra.mxu0 0.0
        %328 = vmatpush.msra.mxu0 0.0
        %329 = vmatpush.msra.mxu0 0.0
        %330 = vmatpush.msra.mxu0 0.0
        %331 = vmatpush.msra.mxu0 0.0
        %332 = vmatpush.msra.mxu0 0.0
        %333 = vmatpush.msra.mxu0 0.0
        %334 = vmatpush.msra.mxu0 0.0
        %335 = vmatpush.msra.mxu0 %v275
        %336 = vmatmul.f32.gmra.mxu0 %v292
        %v337 = vpop.f32.mrf.mxu0
        %v338 = vadd.f32 %v283, %v337
        %339 = vmatmul.f32.gmra.mxu0 %v295
        %v340 = vpop.f32.mrf.mxu0
        %v341 = vadd.f32 %v288, %v340
        %342 = vdwg.mxu0
        %v343 = vmax.f32 %v315, 0.0
        %v344 = vmax.f32 %v338, 0.0
        %v345 = vmax.f32 %v318, 0.0
        %v346 = vmax.f32 %v341, 0.0
        %v347 = vld [vmem:[#allocation2] sm:$0xff]
        %v348 = vld [vmem:[#allocation2 + $0x8] sm:$0xff]
        %v349 = vadd.f32 %v343, %v344
        %350 = vadd.xlane.f32.xlu0 %v349
        %v351 = vpop.xlane.xlu0 %350
        %v352 = vadd.f32 %v345, %v346
        %353 = vadd.xlane.f32.xlu0 %v352
        %v354 = vpop.xlane.xlu0 %353
        %v355 = vadd.f32 %v347, %v351
        %v356 = vadd.f32 %v348, %v354
        %vm357 = vcmask 7168
        %358 = vst.msk [vmem:[#allocation2] sm:$0xff] %vm357, %v355
        %359 = vst.msk [vmem:[#allocation2 + $0x8] sm:$0xff] %vm357, %v356
        // Predicated region
        $region49: #{tpu_custom_call.1} parent=39 // pred_check
          %p360 = pneg %p267
        $region50: #{tpu_custom_call.1} parent=39 // pred_check_branch
          %362 = sbr.rel (%p360) target = $region52
        $region51: #{tpu_custom_call.1} parent=39 // pred_region
          %v363 = vld [vmem:[#allocation2] sm:$0xff]
          %v364 = vld [vmem:[#allocation2 + $0x8] sm:$0xff]
          %v365 = vmul.f32 %v363, 0.00390625
          %v366 = vmul.f32 %v364, 0.00390625
          %v367 = vld [vmem:[#allocation3] sm:$0xff]
          %v368 = vld [vmem:[#allocation3 + $0x8] sm:$0xff]
          %370 = vset.pattern.permute.xlu0 0
          %371 = vperm.xlu0 %370, %v365
          %v372 = vpop.permute.xlu0 %371
          %375 = vset.pattern.permute.xlu0 0
          %376 = vperm.xlu0 %375, %v366
          %v377 = vpop.permute.xlu0 %376
          %v379 = vmul.f32 %v367, %v372
          %v380 = vmul.f32 %v368, %v377
          %v381 = vadd.f32 %v379, %v380
          %v382 = vrot.slane %v381, 4
          %v383 = vadd.f32 %v381, %v382
          %v384 = vrot.slane %v383, 2
          %v385 = vadd.f32 %v383, %v384
          %v386 = vrot.slane %v385, 1
          %v387 = vadd.f32 %v385, %v386
          %v388 = vld [vmem:[%s4] sm:$0x1]
          %v389 = vadd.f32 %v387, %v388
          %390 = vst [vmem:[%s256] sm:$0x1] %v389
        $region52: #{tpu_custom_call.1} parent=39 // pred_fallthru
          _
        %s391 = sand.u32 %s152, 1
        %s392 = scalar_lea.sflag [#allocation5], %s391
        %s393 = sand.u32 %s152, 1
        %s394 = scalar_lea.vmem [#allocation6], %s393
        // Predicated region
        $region53: #{tpu_custom_call.1} parent=39 // pred_check
          %p395 = pneg %p162
        $region54: #{tpu_custom_call.1} parent=39 // pred_check_branch
          %397 = sbr.rel (%p395) target = $region56
        $region55: #{tpu_custom_call.1} parent=39 // pred_region
          %399 = vsyncadd %s392, 0
          %s400 = scalar_lea.hbm %s5, %s24
          %s402 = sshll.u32 %s394, 4
          %s403 = int_to_ptr.vmem [resolvable:$true] %s402
          %s404 = sshll.u32 %s400, 4
          %s405 = int_to_ptr.hbm [resolvable:$true] %s404
          %407 = dma.vmem_to_hbm [thread:$0]  %s403, 16, %s405, %s392
        $region56: #{tpu_custom_call.1} parent=39 // pred_fallthru
          _
      $region40: #{tpu_custom_call.1} parent=5 // pred_fallthru
        _
      %p408 = scmp.le.s32.totalorder 2, %s15
      // Predicated region
      $region57: #{tpu_custom_call.1} parent=5 // pred_check
        %p409 = pneg %p408
      $region58: #{tpu_custom_call.1} parent=5 // pred_check_branch
        %411 = sbr.rel (%p409) target = $region60
      $region59: #{tpu_custom_call.1} parent=5 // pred_region
        %s412 = ssub.s32 %s15, 2
        // Predicated region
        $region61: #{tpu_custom_call.1} parent=59 // pred_check
          %p413 = pneg %p168
        $region62: #{tpu_custom_call.1} parent=59 // pred_check_branch
          %415 = sbr.rel (%p413) target = $region64
        $region63: #{tpu_custom_call.1} parent=59 // pred_region
          %s416 = sand.u32 %s153, 1
          %s417 = scalar_lea.sflag [#allocation5], %s416
          %s418 = sand.u32 %s153, 1
          %s419 = scalar_lea.vmem [#allocation6], %s418
          %421 = dma.done %s417, 16
        $region64: #{tpu_custom_call.1} parent=59 // pred_fallthru
          _
      $region60: #{tpu_custom_call.1} parent=5 // pred_fallthru
        _
    $region6: #{tpu_custom_call.1} parent=1 // loop_footer
      %s19 = sadd.s32 1, %s15
    $region7: #{tpu_custom_call.1} parent=1 // loop_footer_branch
      %14 = sbr.rel target = $region3
    $region8: #{tpu_custom_call.1} parent=1 // loop_exit
      _
    %422 = vsyncpa [#allocation4], 1
    %s423 = scalar_lea.sflag [#allocation4], 1
    %424 = vsyncpa %s423, 1
    %425 = vsyncpa [#allocation5], 1
    %s426 = scalar_lea.sflag [#allocation5], 1
    %427 = vsyncpa %s426, 1

</llo_original>
